<compile_context>
chip_gen: v7x
topology: tpu7x:2x2x1
jax: 0.10.0
libtpu: 0.0.40
codegen_flags: <defaults>
</compile_context>

<pallas_src>
import functools
import math

import jax
import jax.numpy as jnp
from jax.experimental import pallas as pl
from jax.experimental.pallas import tpu as pltpu


def _activation(h, activation_type):
    if activation_type == "gelu":
        # exact (erf) GELU matching torch.nn.GELU default
        return 0.5 * h * (1.0 + jax.lax.erf(h / math.sqrt(2.0)))
    elif activation_type == "elu":
        # clamp the exp argument so the unselected branch never produces inf
        return jnp.where(h > 0, h, jnp.exp(jnp.minimum(h, 0.0)) - 1.0)
    elif activation_type == "relu":
        return jnp.maximum(h, 0.0)
    elif activation_type == "leaky_relu":
        return jnp.where(h > 0, h, 0.01 * h)
    else:
        # TODO(synk): 'prelu' needs a learned alpha parameter; not wired here.
        raise ValueError("Wrong hidden activation function")


def _patch_embedding_kernel(*refs, NB, T1p, T2p, PT, PS, pool_type, activation_type):
    if pool_type == "avg":
        x_ref, wf_ref, bias_ref, pmat_ref, wp_ref, bp_ref, o_ref = refs
        h_scr = None
    else:
        x_ref, wf_ref, bias_ref, wp_ref, bp_ref, o_ref, h_scr = refs
        pmat_ref = None

    KTC = x_ref.shape[-1]
    F2 = o_ref.shape[-1]

    # ---- fused temporal conv + spatial conv + BatchNorm: ONE MXU matmul on the
    #      wrapper-built im2col slab (leading-dim merge is tiling-aligned: T1p % 16 == 0)
    slab = x_ref[...].reshape(NB * T1p, KTC)
    h = jnp.dot(slab, wf_ref[...], preferred_element_type=jnp.float32)
    h = _activation(h + bias_ref[...], activation_type)                 # (NB*T1p, F2) f32

    # ---- Pooling2d over time (window PT, stride PS) ----
    if pool_type == "avg":
        # constant pooling matrix -> small matmuls on the otherwise idle MXU
        pmat = pmat_ref[...]                                            # (T2p, T1p) f32
        parts = [
            jnp.dot(pmat, h[nb * T1p:(nb + 1) * T1p, :],                # 8-aligned row slice
                    preferred_element_type=jnp.float32)
            for nb in range(NB)
        ]
    else:
        # max pooling: stage once through VMEM and read PT strided windows per sample
        h_scr[...] = h
        parts = []
        for nb in range(NB):
            base = nb * T1p                                             # 8-aligned
            acc = h_scr[pl.ds(base, T2p, stride=PS), :]
            for j in range(1, PT):
                acc = jnp.maximum(acc, h_scr[pl.ds(base + j, T2p, stride=PS), :])
            parts.append(acc)
    pooled = parts[0] if NB == 1 else jnp.concatenate(parts, axis=0)    # (NB*T2p, F2)

    # ---- Dropout -> identity at inference; projection 1x1 Conv2d (F2 -> F2) ----
    out = jnp.dot(pooled.astype(wp_ref.dtype), wp_ref[...],
                  preferred_element_type=jnp.float32) + bp_ref[...]     # (NB*T2p, F2)

    # single contiguous store of the whole (NB, T2p, F2) block (T2p % 8 == 0 split is free)
    o_ref[...] = out.reshape(NB, T2p, F2).astype(o_ref.dtype)


def _round_up(n, m):
    return ((n + m - 1) // m) * m


def _pick_batch_block(B, batch_block):
    nb = min(batch_block, B)
    if B % nb == 0:
        return nb
    # prefer a divisor of B close below `nb` so no padding is needed
    for d in range(nb, max(nb // 2, 1) - 1, -1):
        if B % d == 0:
            return d
    return nb  # no nearby divisor: the wrapper pads the batch up to a multiple of nb


def patch_embedding_forward(x, params, *, cnn_temporal_kernelsize, cnn_spatial_kernelsize,
                            cnn_poolsize, cnn_poolstride, cnn_pool_type="avg",
                            activation_type="elu", eps=1e-5, batch_block=16,
                            matmul_dtype=jnp.bfloat16,
                            vmem_limit_bytes=32 * 1024 * 1024):
    B, T, C, one = x.shape
    assert one == 1, "expected trailing singleton conv-channel"
    KT = cnn_temporal_kernelsize[0]
    assert cnn_temporal_kernelsize[1] == 1
    assert tuple(cnn_spatial_kernelsize) == (1, C)
    PT, PS = cnn_poolsize[0], cnn_poolstride[0]
    assert cnn_poolsize[1] == 1 and cnn_poolstride[1] == 1

    F1 = params["w1"].shape[1]
    F2 = params["w2"].shape[1]
    KTC = KT * C
    T1 = T - KT + 1
    T2 = (T1 - PT) // PS + 1

    # Padded extents: T2p multiple of 8 (f32 sublane tile); T1p multiple of 16 so the bf16
    # slab's (NB,T1p)->(NB*T1p) merge is tiling-aligned and the strided max-pool windows of
    # every padded output row stay inside the per-sample region.
    T2p = _round_up(T2, 8)
    T1p = _round_up(max(T1, (T2p - 1) * PS + PT), 16)

    NB = _pick_batch_block(B, batch_block)
    B_pad = _round_up(B, NB)
    n_steps = B_pad // NB

    # ---- fold temporal conv + spatial conv + BatchNorm into one weight / one bias ----
    # (exact elementwise arithmetic; no matmul here, so no extra rounding vs the module)
    w1 = params["w1"].astype(jnp.float32)                               # (KT, F1)
    w2r = params["w2"].astype(jnp.float32).reshape(C, F1, F2)           # row c*F1 + f1
    inv_std = 1.0 / jnp.sqrt(params["bn_var"].astype(jnp.float32) + eps)
    bn_scale = params["bn_gamma"].astype(jnp.float32) * inv_std         # (F2,)
    bn_shift = (params["bn_beta"].astype(jnp.float32)
                - params["bn_mean"].astype(jnp.float32) * bn_scale)     # (F2,)
    # W_comb[k, c, f2] = sum_f1 w1[k, f1] * w2[c*F1 + f1, f2]
    w_comb = (w1[:, None, :, None] * w2r[None, :, :, :]).sum(axis=2)    # (KT, C, F2)
    w_fused = (w_comb * bn_scale[None, None, :]).reshape(KTC, F2).astype(matmul_dtype)
    bias_pre = (params["b1"].astype(jnp.float32)[None, :, None] * w2r).sum(axis=(0, 1)) \
        + params["b2"].astype(jnp.float32)
    bias_fused = (bias_pre * bn_scale + bn_shift).reshape(1, F2).astype(jnp.float32)

    wp = params["wp"].astype(matmul_dtype)                              # (F2, F2)
    bp = params["bp"].reshape(1, F2).astype(jnp.float32)

    # ---- wrapper-side im2col + batch/time padding (cheap XLA ops; keeps the kernel free
    #      of lane-concat / sublane-relayout work). lane index = k*C + c <-> row k*C+c of W.
    x3 = x[..., 0].astype(jnp.float32)                                  # (B, T, C)
    x_col = jnp.concatenate([x3[:, k:k + T1, :] for k in range(KT)], axis=-1)  # (B,T1,KTC)
    x_col = jnp.pad(x_col, ((0, B_pad - B), (0, T1p - T1), (0, 0))).astype(matmul_dtype)

    in_arrays = [x_col, w_fused, bias_fused]
    in_specs = [
        pl.BlockSpec((NB, T1p, KTC), lambda b: (b, 0, 0)),              # NB samples / step
        # grid-invariant operands: constant index_maps -> pipeline does not re-fetch them
        pl.BlockSpec((KTC, F2), lambda b: (0, 0)),                      # fused weight
        pl.BlockSpec((1, F2), lambda b: (0, 0)),                        # fused bias
    ]
    scratch_shapes = []
    if cnn_pool_type == "avg":
        oo = jnp.arange(T2p)[:, None]
        tt = jnp.arange(T1p)[None, :]
        pmat = jnp.where((oo < T2) & (tt >= oo * PS) & (tt < oo * PS + PT),
                         1.0 / PT, 0.0).astype(jnp.float32)             # (T2p, T1p)
        in_arrays.append(pmat)
        in_specs.append(pl.BlockSpec((T2p, T1p), lambda b: (0, 0)))
    else:
        scratch_shapes.append(pltpu.VMEM((NB * T1p, F2), jnp.float32))  # max-pool staging
    in_arrays += [wp, bp]
    in_specs += [pl.BlockSpec((F2, F2), lambda b: (0, 0)),
                 pl.BlockSpec((1, F2), lambda b: (0, 0))]

    kernel = functools.partial(
        _patch_embedding_kernel, NB=NB, T1p=T1p, T2p=T2p, PT=PT, PS=PS,
        pool_type=cnn_pool_type, activation_type=activation_type)

    cost = pl.CostEstimate(
        flops=int(B_pad * (2 * T1p * KTC * F2 + 2 * T2p * T1p * F2 + 2 * T2p * F2 * F2)),
        transcendentals=int(B_pad * T1p * F2) if activation_type in ("elu", "gelu") else 0,
        bytes_accessed=int(x_col.size * x_col.dtype.itemsize
                           + B_pad * T2p * F2 * 4
                           + w_fused.size * w_fused.dtype.itemsize
                           + wp.size * wp.dtype.itemsize + 3 * F2 * 4
                           + (T2p * T1p * 4 if cnn_pool_type == "avg" else 0)),
    )

    out = pl.pallas_call(
        kernel,
        out_shape=jax.ShapeDtypeStruct((B_pad, T2p, F2), jnp.float32),
        grid_spec=pltpu.PrefetchScalarGridSpec(
            num_scalar_prefetch=0,
            grid=(n_steps,),
            in_specs=in_specs,
            out_specs=pl.BlockSpec((NB, T2p, F2), lambda b: (b, 0, 0)),
            scratch_shapes=scratch_shapes,
        ),
        compiler_params=pltpu.CompilerParams(
            dimension_semantics=("parallel",),       # v7x: shards grid steps across 2 TCs
            vmem_limit_bytes=vmem_limit_bytes,       # raises v5e's 16 MiB scoped default
        ),
        cost_estimate=cost,
    )(*in_arrays)

    return out[:B, :T2, :]


def _reference(x, params, *, KT, PT, PS, pool_type, activation_type, eps=1e-5):
    """Pure-JAX, module-faithful (unfused) reference of the same forward pass."""
    B, T, C, _ = x.shape
    F1 = params["w1"].shape[1]
    T1 = T - KT + 1
    T2 = (T1 - PT) // PS + 1
    hp = jax.lax.Precision.HIGHEST
    x3 = x[..., 0].astype(jnp.float32)
    h1 = jnp.zeros((B, T1, C, F1), jnp.float32)
    for k in range(KT):
        h1 = h1 + x3[:, k:k + T1, :, None] * params["w1"][k][None, None, None, :]
    h1 = h1 + params["b1"][None, None, None, :]
    h1f = h1.reshape(B, T1, C * F1)
    h2 = jnp.einsum("btk,kf->btf", h1f, params["w2"], precision=hp) + params["b2"]
    inv_std = 1.0 / jnp.sqrt(params["bn_var"] + eps)
    h2 = (h2 - params["bn_mean"]) * inv_std * params["bn_gamma"] + params["bn_beta"]
    h2 = _activation(h2, activation_type)
    wins = jnp.stack([h2[:, j::PS, :][:, :T2, :] for j in range(PT)], axis=0)
    pooled = wins.mean(axis=0) if pool_type == "avg" else wins.max(axis=0)
    return jnp.einsum("btf,fg->btg", pooled, params["wp"], precision=hp) + params["bp"]


def _make_params(key, C, KT, F1, F2):
    ks = jax.random.split(key, 10)
    return {
        "w1": 0.2 * jax.random.normal(ks[0], (KT, F1), jnp.float32),
        "b1": 0.1 * jax.random.normal(ks[1], (F1,), jnp.float32),
        "w2": 0.2 * jax.random.normal(ks[2], (C * F1, F2), jnp.float32),
        "b2": 0.1 * jax.random.normal(ks[3], (F2,), jnp.float32),
        "bn_gamma": 1.0 + 0.1 * jax.random.normal(ks[4], (F2,), jnp.float32),
        "bn_beta": 0.1 * jax.random.normal(ks[5], (F2,), jnp.float32),
        "bn_mean": 0.1 * jax.random.normal(ks[6], (F2,), jnp.float32),
        "bn_var": 0.5 + jnp.abs(jax.random.normal(ks[7], (F2,), jnp.float32)),
        "wp": 0.2 * jax.random.normal(ks[8], (F2, F2), jnp.float32),
        "bp": 0.1 * jax.random.normal(ks[9], (F2,), jnp.float32),
    }


def _run_case(key, *, B, T, C, KT, F1, F2, PT, PS, pool_type, activation_type,
              matmul_dtype=jnp.bfloat16, batch_block=16, tol=3e-2):
    kx, kp = jax.random.split(key)
    x = jax.random.normal(kx, (B, T, C, 1), dtype=jnp.float32)
    params = _make_params(kp, C, KT, F1, F2)
    out = patch_embedding_forward(
        x, params,
        cnn_temporal_kernelsize=(KT, 1),
        cnn_spatial_kernelsize=(1, C),
        cnn_poolsize=(PT, 1),
        cnn_poolstride=(PS, 1),
        cnn_pool_type=pool_type,
        activation_type=activation_type,
        batch_block=batch_block,
        matmul_dtype=matmul_dtype,
    )
    out = jax.block_until_ready(out)
    ref = _reference(x, params, KT=KT, PT=PT, PS=PS,
                     pool_type=pool_type, activation_type=activation_type)
    T2 = ((T - KT + 1) - PT) // PS + 1
    assert out.shape == (B, T2, F2), out.shape
    # f32 path: 5e-3 covers MXU f32 pass decomposition; bf16 path: 3e-2 covers operand
    # rounding of the fused contraction + projection. Semantic bugs are O(1e-1).
    assert jnp.allclose(out, ref, atol=tol, rtol=tol), float(jnp.max(jnp.abs(out - ref)))


if __name__ == "__main__":
    key = jax.random.PRNGKey(0)
    k1, k2, k3 = jax.random.split(key, 3)
    # exact-semantics check: f32 MXU operands, tight tolerance, avg pooling + ELU
    _run_case(k1, B=2, T=32, C=8, KT=5, F1=8, F2=16, PT=4, PS=4,
              pool_type="avg", activation_type="elu",
              matmul_dtype=jnp.float32, tol=5e-3)
    # default fast path (bf16 MXU operands), avg pooling + ELU, single grid step
    _run_case(k2, B=4, T=32, C=8, KT=5, F1=8, F2=16, PT=4, PS=4,
              pool_type="avg", activation_type="elu")
    # multi-step grid with batch padding (B=7 -> NB=4, B_pad=8, grid=2), max pooling + ReLU
    _run_case(k3, B=7, T=32, C=8, KT=5, F1=8, F2=16, PT=2, PS=2,
              pool_type="max", activation_type="relu", batch_block=4)
    print("KERNEL_OK")
</pallas_src>

<mosaic_0001>
module attributes {stable_mosaic.version = 11 : i64} {
  func.func @_patch_embedding_kernel(%arg0: i32, %arg1: memref<2x32x40xf32, #tpu.memory_space<vmem>>, %arg2: memref<40x16xf32, #tpu.memory_space<vmem>>, %arg3: memref<1x16xf32, #tpu.memory_space<vmem>>, %arg4: memref<8x32xf32, #tpu.memory_space<vmem>>, %arg5: memref<16x16xf32, #tpu.memory_space<vmem>>, %arg6: memref<1x16xf32, #tpu.memory_space<vmem>>, %arg7: memref<2x8x16xf32, #tpu.memory_space<vmem>>) attributes {dimension_semantics = [#tpu.dimension_semantics<parallel>], iteration_bounds = array<i64: 1>, scalar_prefetch = 0 : i64, scratch_operands = 0 : i64, tpu.core_type = #tpu.core_type<tc>, window_params = [{transform_indices = @transform_0, window_bounds = array<i64: 2, 32, 40>}, {pipeline_mode = #tpu.pipeline_mode<synchronous>, transform_indices = @transform_1, window_bounds = array<i64: 40, 16>}, {pipeline_mode = #tpu.pipeline_mode<synchronous>, transform_indices = @transform_2, window_bounds = array<i64: 1, 16>}, {pipeline_mode = #tpu.pipeline_mode<synchronous>, transform_indices = @transform_3, window_bounds = array<i64: 8, 32>}, {pipeline_mode = #tpu.pipeline_mode<synchronous>, transform_indices = @transform_4, window_bounds = array<i64: 16, 16>}, {pipeline_mode = #tpu.pipeline_mode<synchronous>, transform_indices = @transform_5, window_bounds = array<i64: 1, 16>}, {transform_indices = @transform_6, window_bounds = array<i64: 2, 8, 16>}]} {
    %c0 = arith.constant 0 : index
    %c0_0 = arith.constant 0 : index
    %c0_1 = arith.constant 0 : index
    %0 = vector.load %arg1[%c0, %c0_0, %c0_1] : memref<2x32x40xf32, #tpu.memory_space<vmem>>, vector<2x32x40xf32>
    %1 = vector.shape_cast %0 : vector<2x32x40xf32> to vector<64x40xf32>
    %c0_2 = arith.constant 0 : index
    %c0_3 = arith.constant 0 : index
    %2 = vector.load %arg2[%c0_2, %c0_3] : memref<40x16xf32, #tpu.memory_space<vmem>>, vector<40x16xf32>
    %cst = arith.constant dense<0.000000e+00> : vector<64x16xf32>
    %3 = tpu.matmul %1, %2, %cst {dimension_numbers = #tpu.dot_dimension_numbers<[1], [0], [0], [1], [0, 0, 1, 1], [], []>} : vector<64x40xf32>, vector<40x16xf32>, vector<64x16xf32> -> vector<64x16xf32>
    %c0_4 = arith.constant 0 : index
    %c0_5 = arith.constant 0 : index
    %4 = vector.load %arg3[%c0_4, %c0_5] : memref<1x16xf32, #tpu.memory_space<vmem>>, vector<1x16xf32>
    %5 = vector.broadcast %4 : vector<1x16xf32> to vector<64x16xf32>
    %6 = arith.addf %3, %5 : vector<64x16xf32>
    %cst_6 = arith.constant 0.000000e+00 : f32
    %7 = vector.broadcast %cst_6 : f32 to vector<64x16xf32>
    %8 = arith.cmpf ogt, %6, %7 : vector<64x16xf32>
    %cst_7 = arith.constant 0.000000e+00 : f32
    %9 = vector.broadcast %cst_7 : f32 to vector<64x16xf32>
    %10 = arith.minimumf %6, %9 : vector<64x16xf32>
    %11 = math.exp %10 : vector<64x16xf32>
    %cst_8 = arith.constant 1.000000e+00 : f32
    %12 = vector.broadcast %cst_8 : f32 to vector<64x16xf32>
    %13 = arith.subf %11, %12 : vector<64x16xf32>
    %14 = arith.select %8, %6, %13 : vector<64x16xi1>, vector<64x16xf32>
    %c0_9 = arith.constant 0 : index
    %c0_10 = arith.constant 0 : index
    %15 = vector.load %arg4[%c0_9, %c0_10] : memref<8x32xf32, #tpu.memory_space<vmem>>, vector<8x32xf32>
    %16 = vector.extract_strided_slice %14 {offsets = [0, 0], sizes = [32, 16], strides = [1, 1]} : vector<64x16xf32> to vector<32x16xf32>
    %cst_11 = arith.constant dense<0.000000e+00> : vector<8x16xf32>
    %17 = tpu.matmul %15, %16, %cst_11 {dimension_numbers = #tpu.dot_dimension_numbers<[1], [0], [0], [1], [0, 0, 1, 1], [], []>} : vector<8x32xf32>, vector<32x16xf32>, vector<8x16xf32> -> vector<8x16xf32>
    %18 = vector.extract_strided_slice %14 {offsets = [32, 0], sizes = [32, 16], strides = [1, 1]} : vector<64x16xf32> to vector<32x16xf32>
    %cst_12 = arith.constant dense<0.000000e+00> : vector<8x16xf32>
    %19 = tpu.matmul %15, %18, %cst_12 {dimension_numbers = #tpu.dot_dimension_numbers<[1], [0], [0], [1], [0, 0, 1, 1], [], []>} : vector<8x32xf32>, vector<32x16xf32>, vector<8x16xf32> -> vector<8x16xf32>
    %20 = tpu.concatenate %17, %19 in 0 : vector<8x16xf32>, vector<8x16xf32> -> vector<16x16xf32>
    %c0_13 = arith.constant 0 : index
    %c0_14 = arith.constant 0 : index
    %21 = vector.load %arg5[%c0_13, %c0_14] : memref<16x16xf32, #tpu.memory_space<vmem>>, vector<16x16xf32>
    %cst_15 = arith.constant dense<0.000000e+00> : vector<16x16xf32>
    %22 = tpu.matmul %20, %21, %cst_15 {dimension_numbers = #tpu.dot_dimension_numbers<[1], [0], [0], [1], [0, 0, 1, 1], [], []>} : vector<16x16xf32>, vector<16x16xf32>, vector<16x16xf32> -> vector<16x16xf32>
    %c0_16 = arith.constant 0 : index
    %c0_17 = arith.constant 0 : index
    %23 = vector.load %arg6[%c0_16, %c0_17] : memref<1x16xf32, #tpu.memory_space<vmem>>, vector<1x16xf32>
    %24 = vector.broadcast %23 : vector<1x16xf32> to vector<16x16xf32>
    %25 = arith.addf %22, %24 : vector<16x16xf32>
    %26 = vector.shape_cast %25 : vector<16x16xf32> to vector<2x8x16xf32>
    %c0_18 = arith.constant 0 : index
    %c0_19 = arith.constant 0 : index
    %c0_20 = arith.constant 0 : index
    %27 = vector.load %arg7[%c0_18, %c0_19, %c0_20] : memref<2x8x16xf32, #tpu.memory_space<vmem>>, vector<2x8x16xf32>
    tpu.vector_store %arg7[%c0_18, %c0_19, %c0_20], %26 {strides = array<i32>} : memref<2x8x16xf32, #tpu.memory_space<vmem>>, vector<2x8x16xf32>,
    return
  }
  func.func @transform_0(%arg0: i32) -> (i32, i32, i32) {
    %c0_i32 = arith.constant 0 : i32
    %c0_i32_0 = arith.constant 0 : i32
    %c0_i32_1 = arith.constant 0 : i32
    return %arg0, %c0_i32, %c0_i32_0 : i32, i32, i32
  }
  func.func @transform_1(%arg0: i32) -> (i32, i32) {
    %c0_i32 = arith.constant 0 : i32
    %c0_i32_0 = arith.constant 0 : i32
    %c0_i32_1 = arith.constant 0 : i32
    return %c0_i32, %c0_i32_0 : i32, i32
  }
  func.func @transform_2(%arg0: i32) -> (i32, i32) {
    %c0_i32 = arith.constant 0 : i32
    %c0_i32_0 = arith.constant 0 : i32
    %c0_i32_1 = arith.constant 0 : i32
    return %c0_i32, %c0_i32_0 : i32, i32
  }
  func.func @transform_3(%arg0: i32) -> (i32, i32) {
    %c0_i32 = arith.constant 0 : i32
    %c0_i32_0 = arith.constant 0 : i32
    %c0_i32_1 = arith.constant 0 : i32
    return %c0_i32, %c0_i32_0 : i32, i32
  }
  func.func @transform_4(%arg0: i32) -> (i32, i32) {
    %c0_i32 = arith.constant 0 : i32
    %c0_i32_0 = arith.constant 0 : i32
    %c0_i32_1 = arith.constant 0 : i32
    return %c0_i32, %c0_i32_0 : i32, i32
  }
  func.func @transform_5(%arg0: i32) -> (i32, i32) {
    %c0_i32 = arith.constant 0 : i32
    %c0_i32_0 = arith.constant 0 : i32
    %c0_i32_1 = arith.constant 0 : i32
    return %c0_i32, %c0_i32_0 : i32, i32
  }
  func.func @transform_6(%arg0: i32) -> (i32, i32, i32) {
    %c0_i32 = arith.constant 0 : i32
    %c0_i32_0 = arith.constant 0 : i32
    %c0_i32_1 = arith.constant 0 : i32
    return %arg0, %c0_i32, %c0_i32_0 : i32, i32, i32
  }
}

</mosaic_0001>

<llo_original>
// kernel: tpu_custom_call.1
$region0: #{tpu_custom_call.1}
  #allocation0 [shape = 'u32[]', space=smem, size = 0x4, offset = 0x4, fixed_abs, tag = 'smem constant byte address 0x4 - core index']
  #allocation1 [shape = 'u32[144,128]{1,0:T(1,128)}', space=vmem, size = 0x12000, scoped, tag = 'internal scratch']
  %s0 = inlined_call_operand.hbm [shape: f32[2,32,40], index: 0, kind: input, shape index: {}]
  %s1 = inlined_call_operand.vmem [shape: f32[40,16], index: 1, kind: input, shape index: {}]
  %s2 = inlined_call_operand.vmem [shape: f32[1,16], index: 2, kind: input, shape index: {}]
  %s3 = inlined_call_operand.vmem [shape: f32[8,32], index: 3, kind: input, shape index: {}]
  %s4 = inlined_call_operand.vmem [shape: f32[16,16], index: 4, kind: input, shape index: {}]
  %s5 = inlined_call_operand.vmem [shape: f32[1,16], index: 5, kind: input, shape index: {}]
  %s6 = inlined_call_operand.hbm [shape: f32[2,8,16], index: 6, kind: output, shape index: {}]
  %s7 = sld [smem:[#allocation0]]
  $region38: #{tpu_custom_call.1} parent=0
    _
  %s9 = ssub.s32 1, %s7
  %s10 = scalar_select 0, %s9, %s7
  $region1: #{tpu_custom_call.1} parent=0
    #allocation2 [shape = 'u8[32768]{0}', space=vmem, size = 0x8000, scoped, tag = 'input window, operand 0, single buffered']
    #allocation3 [shape = 's32[1]{0}', space=sflag, size = 0x4, scoped, tag = 'scoped memory for tpu_custom_call.1']
    #allocation4 [shape = 's32[1]{0}', space=sflag, size = 0x4, scoped, tag = 'scoped memory for tpu_custom_call.1']
    #allocation5 [shape = 'u8[8192]{0}', space=vmem, size = 0x2000, scoped, tag = 'output window, operand 0, single buffered']
    %11 = vsyncpa [#allocation3], 0
    %12 = vsyncpa [#allocation4], 0
    // Predicated region
    $region2: #{tpu_custom_call.1} parent=1 // pred_check
      _
    $region3: #{tpu_custom_call.1} parent=1 // pred_check_branch
      %14 = sbr.rel (0) target = $region5
    $region4: #{tpu_custom_call.1} parent=1 // pred_region
      %s16 = ssub.s32 1024, 1024
      %17 = vsyncadd [#allocation3], %s16
      %s18 = sshll.u32 [#allocation2], 4
      %s19 = int_to_ptr.vmem [resolvable:$true] %s18
      %24 = dma.hbm_to_vmem [thread:$0]  %s0, 1024, %s19, [#allocation3], 128, 128, 8
    $region5: #{tpu_custom_call.1} parent=1 // pred_fallthru
      _
    // Predicated region
    $region6: #{tpu_custom_call.1} parent=1 // pred_check
      _
    $region7: #{tpu_custom_call.1} parent=1 // pred_check_branch
      %26 = sbr.rel (0) target = $region9
    $region8: #{tpu_custom_call.1} parent=1 // pred_region
      _
    $region9: #{tpu_custom_call.1} parent=1 // pred_fallthru
      _
    // Predicated region
    $region10: #{tpu_custom_call.1} parent=1 // pred_check
      _
    $region11: #{tpu_custom_call.1} parent=1 // pred_check_branch
      %28 = sbr.rel (0) target = $region13
    $region12: #{tpu_custom_call.1} parent=1 // pred_region
      _
    $region13: #{tpu_custom_call.1} parent=1 // pred_fallthru
      _
    // Predicated region
    $region14: #{tpu_custom_call.1} parent=1 // pred_check
      _
    $region15: #{tpu_custom_call.1} parent=1 // pred_check_branch
      %30 = sbr.rel (0) target = $region17
    $region16: #{tpu_custom_call.1} parent=1 // pred_region
      _
    $region17: #{tpu_custom_call.1} parent=1 // pred_fallthru
      _
    // Predicated region
    $region18: #{tpu_custom_call.1} parent=1 // pred_check
      _
    $region19: #{tpu_custom_call.1} parent=1 // pred_check_branch
      %32 = sbr.rel (0) target = $region21
    $region20: #{tpu_custom_call.1} parent=1 // pred_region
      _
    $region21: #{tpu_custom_call.1} parent=1 // pred_fallthru
      _
    // Predicated region
    $region22: #{tpu_custom_call.1} parent=1 // pred_check
      _
    $region23: #{tpu_custom_call.1} parent=1 // pred_check_branch
      %34 = sbr.rel (0) target = $region25
    $region24: #{tpu_custom_call.1} parent=1 // pred_region
      _
    $region25: #{tpu_custom_call.1} parent=1 // pred_fallthru
      _
    // Predicated region
    $region26: #{tpu_custom_call.1} parent=1 // pred_check
      _
    $region27: #{tpu_custom_call.1} parent=1 // pred_check_branch
      %36 = sbr.rel (0) target = $region29
    $region28: #{tpu_custom_call.1} parent=1 // pred_region
      %37 = dma.done [#allocation3], 1024
    $region29: #{tpu_custom_call.1} parent=1 // pred_fallthru
      _
    %v38 = vld [vmem:[#allocation2] sm:$0xff]
    %v39 = vld [vmem:[#allocation2 + $0x8] sm:$0xff]
    %v40 = vld [vmem:[#allocation2 + $0x10] sm:$0xff]
    %v41 = vld [vmem:[#allocation2 + $0x18] sm:$0xff]
    %v42 = vld [vmem:[#allocation2 + $0x20] sm:$0xff]
    %v43 = vld [vmem:[#allocation2 + $0x28] sm:$0xff]
    %v44 = vld [vmem:[#allocation2 + $0x30] sm:$0xff]
    %v45 = vld [vmem:[#allocation2 + $0x38] sm:$0xff]
    %v46 = vld [vmem:[%s1] sm:$0xff]
    %v47 = vld [vmem:[%s1 + $0x8] sm:$0xff]
    %v48 = vld [vmem:[%s1 + $0x10] sm:$0xff]
    %v49 = vld [vmem:[%s1 + $0x18] sm:$0xff]
    %v50 = vld [vmem:[%s1 + $0x20] sm:$0xff]
    %v51 = vld [vmem:[%s2] sm:$0x1]
    %v53 = vlaneseq
    %v54 = vshrl.u32 %v53, 7
    %v55 = vsub.s32 0, %v54
    %v56 = vrot.slane %v51, %v55
    %vm58 = vcmask 326656
    %v60 = vsel %vm58, %v38, 0
    %v63 = vsel %vm58, %v39, 0
    %v66 = vsel %vm58, %v40, 0
    %v69 = vsel %vm58, %v41, 0
    %v72 = vsel %vm58, %v42, 0
    %v75 = vsel %vm58, %v43, 0
    %v78 = vsel %vm58, %v44, 0
    %v81 = vsel %vm58, %v45, 0
    %83 = vmatprep.subr.mxu0 0.0
    %84 = vmatpush1.msra.mxu0 %v46
    %85 = vmatprep.subr.mxu0 0.0
    %86 = vmatpush1.msra.mxu0 %v47
    %87 = vmatprep.subr.mxu0 0.0
    %88 = vmatpush1.msra.mxu0 %v48
    %89 = vmatprep.subr.mxu0 0.0
    %90 = vmatpush1.msra.mxu0 %v49
    %91 = vmatprep.subr.mxu0 0.0
    %92 = vmatpush1.msra.mxu0 %v50
    %93 = vmatprep.subr.mxu0 0.0
    %94 = vmatpush1.msra.mxu0 0.0
    %95 = vmatprep.subr.mxu0 0.0
    %96 = vmatpush1.msra.mxu0 0.0
    %97 = vmatprep.subr.mxu0 0.0
    %98 = vmatpush1.msra.mxu0 0.0
    %99 = vmatprep.subr.mxu0 0.0
    %100 = vmatpush1.msra.mxu0 0.0
    %101 = vmatprep.subr.mxu0 0.0
    %102 = vmatpush1.msra.mxu0 0.0
    %103 = vmatprep.subr.mxu0 0.0
    %104 = vmatpush1.msra.mxu0 0.0
    %105 = vmatprep.subr.mxu0 0.0
    %106 = vmatpush1.msra.mxu0 0.0
    %107 = vmatprep.subr.mxu0 0.0
    %108 = vmatpush1.msra.mxu0 0.0
    %109 = vmatprep.subr.mxu0 0.0
    %110 = vmatpush1.msra.mxu0 0.0
    %111 = vmatprep.subr.mxu0 0.0
    %112 = vmatpush1.msra.mxu0 0.0
    %113 = vmatprep.subr.mxu0 0.0
    %114 = vmatpush1.msra.mxu0 0.0
    %115 = vmatprep.subr.mxu0 0.0
    %116 = vmatpush1.msra.mxu0 0.0
    %117 = vmatprep.subr.mxu0 0.0
    %118 = vmatpush1.msra.mxu0 0.0
    %119 = vmatprep.subr.mxu0 0.0
    %120 = vmatpush1.msra.mxu0 0.0
    %121 = vmatprep.subr.mxu0 0.0
    %122 = vmatpush1.msra.mxu0 0.0
    %123 = vmatprep.subr.mxu0 0.0
    %124 = vmatpush1.msra.mxu0 0.0
    %125 = vmatprep.subr.mxu0 0.0
    %126 = vmatpush1.msra.mxu0 0.0
    %127 = vmatprep.subr.mxu0 0.0
    %128 = vmatpush1.msra.mxu0 0.0
    %129 = vmatprep.subr.mxu0 0.0
    %130 = vmatpush1.msra.mxu0 0.0
    %131 = vmatprep.subr.mxu0 0.0
    %132 = vmatpush1.msra.mxu0 0.0
    %133 = vmatprep.subr.mxu0 0.0
    %134 = vmatpush1.msra.mxu0 0.0
    %135 = vmatprep.subr.mxu0 0.0
    %136 = vmatpush1.msra.mxu0 0.0
    %137 = vmatprep.subr.mxu0 0.0
    %138 = vmatpush1.msra.mxu0 0.0
    %139 = vmatprep.subr.mxu0 0.0
    %140 = vmatpush1.msra.mxu0 0.0
    %141 = vmatprep.subr.mxu0 0.0
    %142 = vmatpush1.msra.mxu0 0.0
    %143 = vmatprep.subr.mxu0 0.0
    %144 = vmatpush1.msra.mxu0 0.0
    %145 = vmatprep.subr.mxu0 0.0
    %146 = vmatpush1.msra.mxu0 0.0
    %147 = vmatprep.mubr.f32.mxu0 0.0
    %148 = vmatmul.mubr.f32.gmra.mrb[0].mxu0 %v60
    %v149 = vpop.f32.mrb[0].mxu0
    %v150 = vadd.f32 %v56, %v149
    %v151 = vpop.f32.mrb[0].mxu0
    %152 = vmatprep.mubr.f32.mxu0 0.0
    %153 = vmatmul.mubr.f32.gmra.mrb[0].mxu0 %v63
    %v154 = vpop.f32.mrb[0].mxu0
    %v155 = vadd.f32 %v56, %v154
    %v156 = vpop.f32.mrb[0].mxu0
    %157 = vmatprep.mubr.f32.mxu0 0.0
    %158 = vmatmul.mubr.f32.gmra.mrb[0].mxu0 %v66
    %v159 = vpop.f32.mrb[0].mxu0
    %v160 = vadd.f32 %v56, %v159
    %v161 = vpop.f32.mrb[0].mxu0
    %162 = vmatprep.mubr.f32.mxu0 0.0
    %163 = vmatmul.mubr.f32.gmra.mrb[0].mxu0 %v69
    %v164 = vpop.f32.mrb[0].mxu0
    %v165 = vadd.f32 %v56, %v164
    %v166 = vpop.f32.mrb[0].mxu0
    %167 = vmatprep.mubr.f32.mxu0 0.0
    %168 = vmatmul.mubr.f32.gmra.mrb[0].mxu0 %v72
    %v169 = vpop.f32.mrb[0].mxu0
    %v170 = vadd.f32 %v56, %v169
    %v171 = vpop.f32.mrb[0].mxu0
    %172 = vmatprep.mubr.f32.mxu0 0.0
    %173 = vmatmul.mubr.f32.gmra.mrb[0].mxu0 %v75
    %v174 = vpop.f32.mrb[0].mxu0
    %v175 = vadd.f32 %v56, %v174
    %v176 = vpop.f32.mrb[0].mxu0
    %177 = vmatprep.mubr.f32.mxu0 0.0
    %178 = vmatmul.mubr.f32.gmra.mrb[0].mxu0 %v78
    %v179 = vpop.f32.mrb[0].mxu0
    %v180 = vadd.f32 %v56, %v179
    %v181 = vpop.f32.mrb[0].mxu0
    %182 = vmatprep.mubr.f32.mxu0 0.0
    %183 = vmatmul.mubr.f32.gmra.mrb[0].mxu0 %v81
    %v184 = vpop.f32.mrb[0].mxu0
    %v185 = vadd.f32 %v56, %v184
    %v186 = vpop.f32.mrb[0].mxu0
    %187 = vdwg.mxu0
    %vm188 = vcmp.gt.f32.partialorder %v150, 0.0
    %vm189 = vcmp.gt.f32.partialorder %v155, 0.0
    %vm190 = vcmp.gt.f32.partialorder %v160, 0.0
    %vm191 = vcmp.gt.f32.partialorder %v165, 0.0
    %vm192 = vcmp.gt.f32.partialorder %v170, 0.0
    %vm193 = vcmp.gt.f32.partialorder %v175, 0.0
    %vm194 = vcmp.gt.f32.partialorder %v180, 0.0
    %vm195 = vcmp.gt.f32.partialorder %v185, 0.0
    %v196 = vmin.f32 %v150, 0.0
    %v197 = vmin.f32 %v155, 0.0
    %v198 = vmin.f32 %v160, 0.0
    %v199 = vmin.f32 %v165, 0.0
    %v200 = vmin.f32 %v170, 0.0
    %v201 = vmin.f32 %v175, 0.0
    %v202 = vmin.f32 %v180, 0.0
    %v203 = vmin.f32 %v185, 0.0
    %v204 = vmul.f32 %v196, 1.442695
    %v205 = vpow.pop %v204
    %v206 = vmul.f32 %v197, 1.442695
    %v207 = vpow.pop %v206
    %v208 = vmul.f32 %v198, 1.442695
    %v209 = vpow.pop %v208
    %v210 = vmul.f32 %v199, 1.442695
    %v211 = vpow.pop %v210
    %v212 = vmul.f32 %v200, 1.442695
    %v213 = vpow.pop %v212
    %v214 = vmul.f32 %v201, 1.442695
    %v215 = vpow.pop %v214
    %v216 = vmul.f32 %v202, 1.442695
    %v217 = vpow.pop %v216
    %v218 = vmul.f32 %v203, 1.442695
    %v219 = vpow.pop %v218
    %v220 = vsub.f32 %v205, 1.0
    %v221 = vsub.f32 %v207, 1.0
    %v222 = vsub.f32 %v209, 1.0
    %v223 = vsub.f32 %v211, 1.0
    %v224 = vsub.f32 %v213, 1.0
    %v225 = vsub.f32 %v215, 1.0
    %v226 = vsub.f32 %v217, 1.0
    %v227 = vsub.f32 %v219, 1.0
    %v228 = vsel %vm188, %v150, %v220
    %v229 = vsel %vm189, %v155, %v221
    %v230 = vsel %vm190, %v160, %v222
    %v231 = vsel %vm191, %v165, %v223
    %v232 = vsel %vm192, %v170, %v224
    %v233 = vsel %vm193, %v175, %v225
    %v234 = vsel %vm194, %v180, %v226
    %v235 = vsel %vm195, %v185, %v227
    %v236 = vld [vmem:[%s3] sm:$0xff]
    %vm237 = vcmask 261120
    %v239 = vsel %vm237, %v236, 0
    %241 = vmatprep.subr.mxu0 0.0
    %242 = vmatpush1.msra.mxu0 %v228
    %243 = vmatprep.subr.mxu0 0.0
    %244 = vmatpush1.msra.mxu0 %v229
    %245 = vmatprep.subr.mxu0 0.0
    %246 = vmatpush1.msra.mxu0 %v230
    %247 = vmatprep.subr.mxu0 0.0
    %248 = vmatpush1.msra.mxu0 %v231
    %249 = vmatprep.subr.mxu0 0.0
    %250 = vmatpush1.msra.mxu0 0.0
    %251 = vmatprep.subr.mxu0 0.0
    %252 = vmatpush1.msra.mxu0 0.0
    %253 = vmatprep.subr.mxu0 0.0
    %254 = vmatpush1.msra.mxu0 0.0
    %255 = vmatprep.subr.mxu0 0.0
    %256 = vmatpush1.msra.mxu0 0.0
    %257 = vmatprep.subr.mxu0 0.0
    %258 = vmatpush1.msra.mxu0 0.0
    %259 = vmatprep.subr.mxu0 0.0
    %260 = vmatpush1.msra.mxu0 0.0
    %261 = vmatprep.subr.mxu0 0.0
    %262 = vmatpush1.msra.mxu0 0.0
    %263 = vmatprep.subr.mxu0 0.0
    %264 = vmatpush1.msra.mxu0 0.0
    %265 = vmatprep.subr.mxu0 0.0
    %266 = vmatpush1.msra.mxu0 0.0
    %267 = vmatprep.subr.mxu0 0.0
    %268 = vmatpush1.msra.mxu0 0.0
    %269 = vmatprep.subr.mxu0 0.0
    %270 = vmatpush1.msra.mxu0 0.0
    %271 = vmatprep.subr.mxu0 0.0
    %272 = vmatpush1.msra.mxu0 0.0
    %273 = vmatprep.subr.mxu0 0.0
    %274 = vmatpush1.msra.mxu0 0.0
    %275 = vmatprep.subr.mxu0 0.0
    %276 = vmatpush1.msra.mxu0 0.0
    %277 = vmatprep.subr.mxu0 0.0
    %278 = vmatpush1.msra.mxu0 0.0
    %279 = vmatprep.subr.mxu0 0.0
    %280 = vmatpush1.msra.mxu0 0.0
    %281 = vmatprep.subr.mxu0 0.0
    %282 = vmatpush1.msra.mxu0 0.0
    %283 = vmatprep.subr.mxu0 0.0
    %284 = vmatpush1.msra.mxu0 0.0
    %285 = vmatprep.subr.mxu0 0.0
    %286 = vmatpush1.msra.mxu0 0.0
    %287 = vmatprep.subr.mxu0 0.0
    %288 = vmatpush1.msra.mxu0 0.0
    %289 = vmatprep.subr.mxu0 0.0
    %290 = vmatpush1.msra.mxu0 0.0
    %291 = vmatprep.subr.mxu0 0.0
    %292 = vmatpush1.msra.mxu0 0.0
    %293 = vmatprep.subr.mxu0 0.0
    %294 = vmatpush1.msra.mxu0 0.0
    %295 = vmatprep.subr.mxu0 0.0
    %296 = vmatpush1.msra.mxu0 0.0
    %297 = vmatprep.subr.mxu0 0.0
    %298 = vmatpush1.msra.mxu0 0.0
    %299 = vmatprep.subr.mxu0 0.0
    %300 = vmatpush1.msra.mxu0 0.0
    %301 = vmatprep.subr.mxu0 0.0
    %302 = vmatpush1.msra.mxu0 0.0
    %303 = vmatprep.subr.mxu0 0.0
    %304 = vmatpush1.msra.mxu0 0.0
    %305 = vmatprep.mubr.f32.mxu0 0.0
    %306 = vmatmul.mubr.f32.gmra.mrb[0].mxu0 %v239
    %v307 = vpop.f32.mrb[0].mxu0
    %v308 = vadd.f32 0.0, %v307
    %v309 = vpop.f32.mrb[0].mxu0
    %310 = vdwg.mxu0
    %311 = vmatprep.subr.mxu0 0.0
    %312 = vmatpush1.msra.mxu0 %v232
    %313 = vmatprep.subr.mxu0 0.0
    %314 = vmatpush1.msra.mxu0 %v233
    %315 = vmatprep.subr.mxu0 0.0
    %316 = vmatpush1.msra.mxu0 %v234
    %317 = vmatprep.subr.mxu0 0.0
    %318 = vmatpush1.msra.mxu0 %v235
    %319 = vmatprep.subr.mxu0 0.0
    %320 = vmatpush1.msra.mxu0 0.0
    %321 = vmatprep.subr.mxu0 0.0
    %322 = vmatpush1.msra.mxu0 0.0
    %323 = vmatprep.subr.mxu0 0.0
    %324 = vmatpush1.msra.mxu0 0.0
    %325 = vmatprep.subr.mxu0 0.0
    %326 = vmatpush1.msra.mxu0 0.0
    %327 = vmatprep.subr.mxu0 0.0
    %328 = vmatpush1.msra.mxu0 0.0
    %329 = vmatprep.subr.mxu0 0.0
    %330 = vmatpush1.msra.mxu0 0.0
    %331 = vmatprep.subr.mxu0 0.0
    %332 = vmatpush1.msra.mxu0 0.0
    %333 = vmatprep.subr.mxu0 0.0
    %334 = vmatpush1.msra.mxu0 0.0
    %335 = vmatprep.subr.mxu0 0.0
    %336 = vmatpush1.msra.mxu0 0.0
    %337 = vmatprep.subr.mxu0 0.0
    %338 = vmatpush1.msra.mxu0 0.0
    %339 = vmatprep.subr.mxu0 0.0
    %340 = vmatpush1.msra.mxu0 0.0
    %341 = vmatprep.subr.mxu0 0.0
    %342 = vmatpush1.msra.mxu0 0.0
    %343 = vmatprep.subr.mxu0 0.0
    %344 = vmatpush1.msra.mxu0 0.0
    %345 = vmatprep.subr.mxu0 0.0
    %346 = vmatpush1.msra.mxu0 0.0
    %347 = vmatprep.subr.mxu0 0.0
    %348 = vmatpush1.msra.mxu0 0.0
    %349 = vmatprep.subr.mxu0 0.0
    %350 = vmatpush1.msra.mxu0 0.0
    %351 = vmatprep.subr.mxu0 0.0
    %352 = vmatpush1.msra.mxu0 0.0
    %353 = vmatprep.subr.mxu0 0.0
    %354 = vmatpush1.msra.mxu0 0.0
    %355 = vmatprep.subr.mxu0 0.0
    %356 = vmatpush1.msra.mxu0 0.0
    %357 = vmatprep.subr.mxu0 0.0
    %358 = vmatpush1.msra.mxu0 0.0
    %359 = vmatprep.subr.mxu0 0.0
    %360 = vmatpush1.msra.mxu0 0.0
    %361 = vmatprep.subr.mxu0 0.0
    %362 = vmatpush1.msra.mxu0 0.0
    %363 = vmatprep.subr.mxu0 0.0
    %364 = vmatpush1.msra.mxu0 0.0
    %365 = vmatprep.subr.mxu0 0.0
    %366 = vmatpush1.msra.mxu0 0.0
    %367 = vmatprep.subr.mxu0 0.0
    %368 = vmatpush1.msra.mxu0 0.0
    %369 = vmatprep.subr.mxu0 0.0
    %370 = vmatpush1.msra.mxu0 0.0
    %371 = vmatprep.subr.mxu0 0.0
    %372 = vmatpush1.msra.mxu0 0.0
    %373 = vmatprep.subr.mxu0 0.0
    %374 = vmatpush1.msra.mxu0 0.0
    %375 = vmatprep.mubr.f32.mxu0 0.0
    %376 = vmatmul.mubr.f32.gmra.mrb[0].mxu0 %v239
    %v377 = vpop.f32.mrb[0].mxu0
    %v378 = vadd.f32 0.0, %v377
    %v379 = vpop.f32.mrb[0].mxu0
    %380 = vdwg.mxu0
    %v381 = vld [vmem:[%s4] sm:$0xff]
    %v382 = vld [vmem:[%s4 + $0x8] sm:$0xff]
    %v383 = vld [vmem:[%s5] sm:$0x1]
    %v385 = vlaneseq
    %v386 = vshrl.u32 %v385, 7
    %v387 = vsub.s32 0, %v386
    %v388 = vrot.slane %v383, %v387
    %vm390 = vcmask 130048
    %v392 = vsel %vm390, %v308, 0
    %v395 = vsel %vm390, %v378, 0
    %397 = vmatprep.subr.mxu0 0.0
    %398 = vmatpush1.msra.mxu0 %v381
    %399 = vmatprep.subr.mxu0 0.0
    %400 = vmatpush1.msra.mxu0 %v382
    %401 = vmatprep.subr.mxu0 0.0
    %402 = vmatpush1.msra.mxu0 0.0
    %403 = vmatprep.subr.mxu0 0.0
    %404 = vmatpush1.msra.mxu0 0.0
    %405 = vmatprep.subr.mxu0 0.0
    %406 = vmatpush1.msra.mxu0 0.0
    %407 = vmatprep.subr.mxu0 0.0
    %408 = vmatpush1.msra.mxu0 0.0
    %409 = vmatprep.subr.mxu0 0.0
    %410 = vmatpush1.msra.mxu0 0.0
    %411 = vmatprep.subr.mxu0 0.0
    %412 = vmatpush1.msra.mxu0 0.0
    %413 = vmatprep.subr.mxu0 0.0
    %414 = vmatpush1.msra.mxu0 0.0
    %415 = vmatprep.subr.mxu0 0.0
    %416 = vmatpush1.msra.mxu0 0.0
    %417 = vmatprep.subr.mxu0 0.0
    %418 = vmatpush1.msra.mxu0 0.0
    %419 = vmatprep.subr.mxu0 0.0
    %420 = vmatpush1.msra.mxu0 0.0
    %421 = vmatprep.subr.mxu0 0.0
    %422 = vmatpush1.msra.mxu0 0.0
    %423 = vmatprep.subr.mxu0 0.0
    %424 = vmatpush1.msra.mxu0 0.0
    %425 = vmatprep.subr.mxu0 0.0
    %426 = vmatpush1.msra.mxu0 0.0
    %427 = vmatprep.subr.mxu0 0.0
    %428 = vmatpush1.msra.mxu0 0.0
    %429 = vmatprep.subr.mxu0 0.0
    %430 = vmatpush1.msra.mxu0 0.0
    %431 = vmatprep.subr.mxu0 0.0
    %432 = vmatpush1.msra.mxu0 0.0
    %433 = vmatprep.subr.mxu0 0.0
    %434 = vmatpush1.msra.mxu0 0.0
    %435 = vmatprep.subr.mxu0 0.0
    %436 = vmatpush1.msra.mxu0 0.0
    %437 = vmatprep.subr.mxu0 0.0
    %438 = vmatpush1.msra.mxu0 0.0
    %439 = vmatprep.subr.mxu0 0.0
    %440 = vmatpush1.msra.mxu0 0.0
    %441 = vmatprep.subr.mxu0 0.0
    %442 = vmatpush1.msra.mxu0 0.0
    %443 = vmatprep.subr.mxu0 0.0
    %444 = vmatpush1.msra.mxu0 0.0
    %445 = vmatprep.subr.mxu0 0.0
    %446 = vmatpush1.msra.mxu0 0.0
    %447 = vmatprep.subr.mxu0 0.0
    %448 = vmatpush1.msra.mxu0 0.0
    %449 = vmatprep.subr.mxu0 0.0
    %450 = vmatpush1.msra.mxu0 0.0
    %451 = vmatprep.subr.mxu0 0.0
    %452 = vmatpush1.msra.mxu0 0.0
    %453 = vmatprep.subr.mxu0 0.0
    %454 = vmatpush1.msra.mxu0 0.0
    %455 = vmatprep.subr.mxu0 0.0
    %456 = vmatpush1.msra.mxu0 0.0
    %457 = vmatprep.subr.mxu0 0.0
    %458 = vmatpush1.msra.mxu0 0.0
    %459 = vmatprep.subr.mxu0 0.0
    %460 = vmatpush1.msra.mxu0 0.0
    %461 = vmatprep.mubr.f32.mxu0 0.0
    %462 = vmatmul.mubr.f32.gmra.mrb[0].mxu0 %v392
    %v463 = vpop.f32.mrb[0].mxu0
    %v464 = vadd.f32 %v388, %v463
    %v465 = vpop.f32.mrb[0].mxu0
    %466 = vmatprep.mubr.f32.mxu0 0.0
    %467 = vmatmul.mubr.f32.gmra.mrb[0].mxu0 %v395
    %v468 = vpop.f32.mrb[0].mxu0
    %v469 = vadd.f32 %v388, %v468
    %v470 = vpop.f32.mrb[0].mxu0
    %471 = vdwg.mxu0
    %472 = vst.msk [vmem:[#allocation5] sm:$0xff] %vm390, %v464
    %473 = vst.msk [vmem:[#allocation5 + $0x8] sm:$0xff] %vm390, %v469
    // Predicated region
    $region30: #{tpu_custom_call.1} parent=1 // pred_check
      _
    $region31: #{tpu_custom_call.1} parent=1 // pred_check_branch
      %475 = sbr.rel (0) target = $region33
    $region32: #{tpu_custom_call.1} parent=1 // pred_region
      %s477 = ssub.s32 256, 256
      %478 = vsyncadd [#allocation4], %s477
      %s479 = sshll.u32 [#allocation5], 4
      %s480 = int_to_ptr.vmem [resolvable:$true] %s479
      %485 = dma.vmem_to_hbm [thread:$0]  %s480, 256, %s6, [#allocation4], 128, 128, 8
    $region33: #{tpu_custom_call.1} parent=1 // pred_fallthru
      _
    // Predicated region
    $region34: #{tpu_custom_call.1} parent=1 // pred_check
      _
    $region35: #{tpu_custom_call.1} parent=1 // pred_check_branch
      %487 = sbr.rel (0) target = $region37
    $region36: #{tpu_custom_call.1} parent=1 // pred_region
      %488 = dma.done [#allocation4], 256
    $region37: #{tpu_custom_call.1} parent=1 // pred_fallthru
      _
    %489 = vsyncpa [#allocation3], 1
    %490 = vsyncpa [#allocation4], 1

</llo_original>
